<compile_context>
chip_gen: v5e
topology: v5e:2x2
jax: 0.10.0
libtpu: 0.0.40
codegen_flags: <defaults>
</compile_context>

<pallas_src>
import functools

import jax
import jax.numpy as jnp
from jax.experimental import pallas as pl
from jax.experimental.pallas import tpu as pltpu

LANE = 128
SUBLANE = 8


def _round_up(v, m):
    return ((v + m - 1) // m) * m


def mlp_kernel(x_ref, w1_ref, b1_ref, w2_ref, b2_ref, w3_ref, b3_ref, o_ref):
    # layer1: Linear + ReLU. Cast x to the weight dtype so bf16 weights use the
    # bf16 MXU path; accumulation stays f32 via preferred_element_type.
    h1 = jnp.dot(x_ref[...].astype(w1_ref.dtype), w1_ref[...],
                 preferred_element_type=jnp.float32)
    h1 = jnp.maximum(h1 + b1_ref[...].astype(jnp.float32), 0.0)
    # layer2: Linear + ReLU
    h2 = jnp.dot(h1.astype(w2_ref.dtype), w2_ref[...],
                 preferred_element_type=jnp.float32)
    h2 = jnp.maximum(h2 + b2_ref[...].astype(jnp.float32), 0.0)
    # layer3: Linear (no activation)
    out = jnp.dot(h2.astype(w3_ref.dtype), w3_ref[...],
                  preferred_element_type=jnp.float32)
    out = out + b3_ref[...].astype(jnp.float32)
    o_ref[...] = out.astype(o_ref.dtype)


def _choose_tiling(B, target_tile):
    """Balanced batch tiles: multiple of 8 sublanes, no near-empty last tile,
    and >=2 grid steps when B permits (so v7x megacore can shard the grid)."""
    num_tiles = max(1, -(-B // target_tile))
    if num_tiles == 1 and B >= 2 * SUBLANE:
        num_tiles = 2  # engage both TensorCores on v7x; harmless on v5e/v6e
    tile_b = _round_up(-(-B // num_tiles), SUBLANE)
    b_pad = tile_b * num_tiles
    return tile_b, b_pad, num_tiles


def prepare_params(params, dtype=None):
    """One-time prep: pad hidden dims to the 128-lane width and optionally cast
    weights (e.g. to bf16).  Zero-padding is exact: padded hidden columns get
    bias 0 -> ReLU(0)=0 and feed zero rows of the next weight.  The input (K of
    layer 1) and output feature dims are left UNPADDED so the streamed x / out
    tensors carry no wasted HBM bytes."""
    w1, b1, w2, b2, w3, b3 = params
    h1_d = w1.shape[1]
    h2_d = w2.shape[1]
    h1_p = _round_up(h1_d, LANE)
    h2_p = _round_up(h2_d, LANE)

    cast_w = (lambda a: a.astype(dtype)) if dtype is not None else (lambda a: a)

    w1p = jnp.pad(cast_w(w1), ((0, 0), (0, h1_p - h1_d)))
    b1p = jnp.pad(b1, ((0, 0), (0, h1_p - h1_d)))          # biases stay f32
    w2p = jnp.pad(cast_w(w2), ((0, h1_p - h1_d), (0, h2_p - h2_d)))
    b2p = jnp.pad(b2, ((0, 0), (0, h2_p - h2_d)))
    w3p = jnp.pad(cast_w(w3), ((0, h2_p - h2_d), (0, 0)))
    b3p = b3
    return (w1p, b1p, w2p, b2p, w3p, b3p)


@functools.partial(jax.jit, static_argnames=("target_tile",))
def net_forward(x, prepared, *, target_tile=512):
    """Fused 3-layer MLP forward on pre-padded params from prepare_params()."""
    w1, b1, w2, b2, w3, b3 = prepared
    B, in_d = x.shape
    h1_p = w1.shape[1]
    h2_p = w2.shape[1]
    out_d = w3.shape[1]

    tile_b, b_pad, num_tiles = _choose_tiling(B, target_tile)
    x_p = jnp.pad(x, ((0, b_pad - B), (0, 0))) if b_pad != B else x

    grid = (num_tiles,)

    # Activation stream tiled over batch (double-buffered by the pipeline);
    # weights/biases pinned to block (0,0) so they stay VMEM-resident.
    in_specs = [
        pl.BlockSpec((tile_b, in_d), lambda i: (i, 0)),
        pl.BlockSpec((in_d, h1_p), lambda i: (0, 0)),
        pl.BlockSpec((1, h1_p), lambda i: (0, 0)),
        pl.BlockSpec((h1_p, h2_p), lambda i: (0, 0)),
        pl.BlockSpec((1, h2_p), lambda i: (0, 0)),
        pl.BlockSpec((h2_p, out_d), lambda i: (0, 0)),
        pl.BlockSpec((1, out_d), lambda i: (0, 0)),
    ]
    out_specs = pl.BlockSpec((tile_b, out_d), lambda i: (i, 0))

    # Explicit VMEM budget: streamed tiles (2x for double-buffering), resident
    # weights (2x: default buffering), f32 intermediates; 2x headroom, clamped
    # to 64 MiB so it stays legal on v7x's smaller per-TC VMEM.
    xb = x.dtype.itemsize
    w_bytes = sum(a.size * a.dtype.itemsize for a in (w1, b1, w2, b2, w3, b3))
    vmem_need = (2 * tile_b * (in_d + out_d) * xb
                 + 2 * w_bytes
                 + tile_b * (h1_p + h2_p + out_d) * 4)
    vmem_limit = min(64 * 1024 * 1024, max(32 * 1024 * 1024, 2 * vmem_need))

    cost = pl.CostEstimate(
        flops=2 * b_pad * (in_d * h1_p + h1_p * h2_p + h2_p * out_d),
        transcendentals=0,
        bytes_accessed=b_pad * (in_d + out_d) * xb + w_bytes,
    )

    out_padded = pl.pallas_call(
        mlp_kernel,
        out_shape=jax.ShapeDtypeStruct((b_pad, out_d), x.dtype),
        grid=grid,
        in_specs=in_specs,
        out_specs=out_specs,
        compiler_params=pltpu.CompilerParams(
            dimension_semantics=("parallel",),
            vmem_limit_bytes=int(vmem_limit)),
        cost_estimate=cost,
    )(x_p, w1, b1, w2, b2, w3, b3)

    return out_padded[:B] if b_pad != B else out_padded


def init_params(key, in_d, hid1_d, hid2_d, out_d, dtype=jnp.float32):
    """Deterministic init mimicking nn.Linear's uniform(-1/sqrt(fan_in), +)."""
    ks = jax.random.split(key, 6)

    def linear(kw, kb, fan_in, fan_out):
        bound = 1.0 / jnp.sqrt(fan_in)
        # stored as [in, out] (transposed from PyTorch's [out, in])
        w = jax.random.uniform(kw, (fan_in, fan_out), dtype, -bound, bound)
        b = jax.random.uniform(kb, (1, fan_out), dtype, -bound, bound)
        return w, b

    w1, b1 = linear(ks[0], ks[1], in_d, hid1_d)
    w2, b2 = linear(ks[2], ks[3], hid1_d, hid2_d)
    w3, b3 = linear(ks[4], ks[5], hid2_d, out_d)
    return (w1, b1, w2, b2, w3, b3)


def reference_forward(x, params):
    w1, b1, w2, b2, w3, b3 = params
    h1 = jnp.maximum(x.astype(jnp.float32) @ w1.astype(jnp.float32) + b1, 0.0)
    h2 = jnp.maximum(h1 @ w2.astype(jnp.float32) + b2, 0.0)
    return h2 @ w3.astype(jnp.float32) + b3


if __name__ == "__main__":
    # Small shapes consistent with Net(in_d=32, hid1_d=64, hid2_d=64, out_d=16)
    B, in_d, hid1_d, hid2_d, out_d = 8, 32, 64, 64, 16

    key = jax.random.PRNGKey(0)
    kx, kp = jax.random.split(key)
    x = jax.random.normal(kx, (B, in_d), jnp.float32)
    params = init_params(kp, in_d, hid1_d, hid2_d, out_d, dtype=jnp.float32)

    # Pad/cast weights ONCE (not per forward call).  For bf16 MXU on any chip
    # (incl. v5e) use: prepared = prepare_params(params, dtype=jnp.bfloat16)
    # and loosen the tolerance below accordingly.
    prepared = prepare_params(params)

    out = net_forward(x, prepared)
    out = jax.block_until_ready(out)

    ref = reference_forward(x, params)
    assert out.shape == (B, out_d), out.shape
    assert jnp.allclose(out, ref, atol=1e-5, rtol=1e-5), "mismatch vs reference"

    print("KERNEL_OK")
</pallas_src>

<mosaic_0001>
module attributes {stable_mosaic.version = 11 : i64} {
  func.func @mlp_kernel(%arg0: i32, %arg1: memref<8x32xf32, #tpu.memory_space<vmem>>, %arg2: memref<32x128xf32, #tpu.memory_space<vmem>>, %arg3: memref<1x128xf32, #tpu.memory_space<vmem>>, %arg4: memref<128x128xf32, #tpu.memory_space<vmem>>, %arg5: memref<1x128xf32, #tpu.memory_space<vmem>>, %arg6: memref<128x16xf32, #tpu.memory_space<vmem>>, %arg7: memref<1x16xf32, #tpu.memory_space<vmem>>, %arg8: memref<8x16xf32, #tpu.memory_space<vmem>>) attributes {dimension_semantics = [#tpu.dimension_semantics<parallel>], iteration_bounds = array<i64: 1>, scalar_prefetch = 0 : i64, scratch_operands = 0 : i64, tpu.core_type = #tpu.core_type<tc>, window_params = [{transform_indices = @transform_0, window_bounds = array<i64: 8, 32>}, {pipeline_mode = #tpu.pipeline_mode<synchronous>, transform_indices = @transform_1, window_bounds = array<i64: 32, 128>}, {pipeline_mode = #tpu.pipeline_mode<synchronous>, transform_indices = @transform_2, window_bounds = array<i64: 1, 128>}, {pipeline_mode = #tpu.pipeline_mode<synchronous>, transform_indices = @transform_3, window_bounds = array<i64: 128, 128>}, {pipeline_mode = #tpu.pipeline_mode<synchronous>, transform_indices = @transform_4, window_bounds = array<i64: 1, 128>}, {pipeline_mode = #tpu.pipeline_mode<synchronous>, transform_indices = @transform_5, window_bounds = array<i64: 128, 16>}, {pipeline_mode = #tpu.pipeline_mode<synchronous>, transform_indices = @transform_6, window_bounds = array<i64: 1, 16>}, {transform_indices = @transform_7, window_bounds = array<i64: 8, 16>}]} {
    %c0 = arith.constant 0 : index
    %c0_0 = arith.constant 0 : index
    %0 = vector.load %arg1[%c0, %c0_0] : memref<8x32xf32, #tpu.memory_space<vmem>>, vector<8x32xf32>
    %c0_1 = arith.constant 0 : index
    %c0_2 = arith.constant 0 : index
    %1 = vector.load %arg2[%c0_1, %c0_2] : memref<32x128xf32, #tpu.memory_space<vmem>>, vector<32x128xf32>
    %cst = arith.constant dense<0.000000e+00> : vector<8x128xf32>
    %2 = tpu.matmul %0, %1, %cst {dimension_numbers = #tpu.dot_dimension_numbers<[1], [0], [0], [1], [0, 0, 1, 1], [], []>} : vector<8x32xf32>, vector<32x128xf32>, vector<8x128xf32> -> vector<8x128xf32>
    %c0_3 = arith.constant 0 : index
    %c0_4 = arith.constant 0 : index
    %3 = vector.load %arg3[%c0_3, %c0_4] : memref<1x128xf32, #tpu.memory_space<vmem>>, vector<1x128xf32>
    %4 = vector.broadcast %3 : vector<1x128xf32> to vector<8x128xf32>
    %5 = arith.addf %2, %4 : vector<8x128xf32>
    %cst_5 = arith.constant 0.000000e+00 : f32
    %6 = vector.broadcast %cst_5 : f32 to vector<8x128xf32>
    %7 = arith.maximumf %5, %6 : vector<8x128xf32>
    %c0_6 = arith.constant 0 : index
    %c0_7 = arith.constant 0 : index
    %8 = vector.load %arg4[%c0_6, %c0_7] : memref<128x128xf32, #tpu.memory_space<vmem>>, vector<128x128xf32>
    %cst_8 = arith.constant dense<0.000000e+00> : vector<8x128xf32>
    %9 = tpu.matmul %7, %8, %cst_8 {dimension_numbers = #tpu.dot_dimension_numbers<[1], [0], [0], [1], [0, 0, 1, 1], [], []>} : vector<8x128xf32>, vector<128x128xf32>, vector<8x128xf32> -> vector<8x128xf32>
    %c0_9 = arith.constant 0 : index
    %c0_10 = arith.constant 0 : index
    %10 = vector.load %arg5[%c0_9, %c0_10] : memref<1x128xf32, #tpu.memory_space<vmem>>, vector<1x128xf32>
    %11 = vector.broadcast %10 : vector<1x128xf32> to vector<8x128xf32>
    %12 = arith.addf %9, %11 : vector<8x128xf32>
    %cst_11 = arith.constant 0.000000e+00 : f32
    %13 = vector.broadcast %cst_11 : f32 to vector<8x128xf32>
    %14 = arith.maximumf %12, %13 : vector<8x128xf32>
    %c0_12 = arith.constant 0 : index
    %c0_13 = arith.constant 0 : index
    %15 = vector.load %arg6[%c0_12, %c0_13] : memref<128x16xf32, #tpu.memory_space<vmem>>, vector<128x16xf32>
    %cst_14 = arith.constant dense<0.000000e+00> : vector<8x16xf32>
    %16 = tpu.matmul %14, %15, %cst_14 {dimension_numbers = #tpu.dot_dimension_numbers<[1], [0], [0], [1], [0, 0, 1, 1], [], []>} : vector<8x128xf32>, vector<128x16xf32>, vector<8x16xf32> -> vector<8x16xf32>
    %c0_15 = arith.constant 0 : index
    %c0_16 = arith.constant 0 : index
    %17 = vector.load %arg7[%c0_15, %c0_16] : memref<1x16xf32, #tpu.memory_space<vmem>>, vector<1x16xf32>
    %18 = vector.broadcast %17 : vector<1x16xf32> to vector<8x16xf32>
    %19 = arith.addf %16, %18 : vector<8x16xf32>
    %c0_17 = arith.constant 0 : index
    %c0_18 = arith.constant 0 : index
    %20 = vector.load %arg8[%c0_17, %c0_18] : memref<8x16xf32, #tpu.memory_space<vmem>>, vector<8x16xf32>
    tpu.vector_store %arg8[%c0_17, %c0_18], %19 {strides = array<i32>} : memref<8x16xf32, #tpu.memory_space<vmem>>, vector<8x16xf32>,
    return
  }
  func.func @transform_0(%arg0: i32) -> (i32, i32) {
    %c0_i32 = arith.constant 0 : i32
    %c0_i32_0 = arith.constant 0 : i32
    return %arg0, %c0_i32 : i32, i32
  }
  func.func @transform_1(%arg0: i32) -> (i32, i32) {
    %c0_i32 = arith.constant 0 : i32
    %c0_i32_0 = arith.constant 0 : i32
    %c0_i32_1 = arith.constant 0 : i32
    return %c0_i32, %c0_i32_0 : i32, i32
  }
  func.func @transform_2(%arg0: i32) -> (i32, i32) {
    %c0_i32 = arith.constant 0 : i32
    %c0_i32_0 = arith.constant 0 : i32
    %c0_i32_1 = arith.constant 0 : i32
    return %c0_i32, %c0_i32_0 : i32, i32
  }
  func.func @transform_3(%arg0: i32) -> (i32, i32) {
    %c0_i32 = arith.constant 0 : i32
    %c0_i32_0 = arith.constant 0 : i32
    %c0_i32_1 = arith.constant 0 : i32
    return %c0_i32, %c0_i32_0 : i32, i32
  }
  func.func @transform_4(%arg0: i32) -> (i32, i32) {
    %c0_i32 = arith.constant 0 : i32
    %c0_i32_0 = arith.constant 0 : i32
    %c0_i32_1 = arith.constant 0 : i32
    return %c0_i32, %c0_i32_0 : i32, i32
  }
  func.func @transform_5(%arg0: i32) -> (i32, i32) {
    %c0_i32 = arith.constant 0 : i32
    %c0_i32_0 = arith.constant 0 : i32
    %c0_i32_1 = arith.constant 0 : i32
    return %c0_i32, %c0_i32_0 : i32, i32
  }
  func.func @transform_6(%arg0: i32) -> (i32, i32) {
    %c0_i32 = arith.constant 0 : i32
    %c0_i32_0 = arith.constant 0 : i32
    %c0_i32_1 = arith.constant 0 : i32
    return %c0_i32, %c0_i32_0 : i32, i32
  }
  func.func @transform_7(%arg0: i32) -> (i32, i32) {
    %c0_i32 = arith.constant 0 : i32
    %c0_i32_0 = arith.constant 0 : i32
    return %arg0, %c0_i32 : i32, i32
  }
}

</mosaic_0001>

<llo_original>
// kernel: net_forward.1
$region0: #{net_forward.1}
  #allocation0 [shape = 'u32[]', space=smem, size = 0x4, offset = 0x4, fixed_abs, tag = 'smem constant byte address 0x4 - core index']
  #allocation1 [shape = 'u32[72,128]{1,0:T(1,128)}', space=vmem, size = 0x9000, scoped, tag = 'internal scratch']
  %s0 = inlined_call_operand.vmem [shape: f32[8,32], index: 0, kind: input, shape index: {}]
  %s1 = inlined_call_operand.hbm [shape: f32[32,128], index: 1, kind: input, shape index: {}]
  %s2 = inlined_call_operand.vmem [shape: f32[1,128], index: 2, kind: input, shape index: {}]
  %s3 = inlined_call_operand.vmem [shape: f32[128,128], index: 3, kind: input, shape index: {}]
  %s4 = inlined_call_operand.vmem [shape: f32[1,128], index: 4, kind: input, shape index: {}]
  %s5 = inlined_call_operand.vmem [shape: f32[128,16], index: 5, kind: input, shape index: {}]
  %s6 = inlined_call_operand.vmem [shape: f32[1,16], index: 6, kind: input, shape index: {}]
  %s7 = inlined_call_operand.hbm [shape: f32[8,16], index: 7, kind: output, shape index: {}]
  %s8 = sld [smem:[#allocation0]]
  $region42: #{net_forward.1} parent=0
    _
  %s10 = ssub.s32 1, %s8
  %s11 = scalar_select 0, %s10, %s8
  $region1: #{net_forward.1} parent=0
    #allocation2 [shape = 'u8[16384]{0}', space=vmem, size = 0x4000, scoped, tag = 'input window, operand 1, single buffered']
    #allocation3 [shape = 's32[1]{0}', space=sflag, size = 0x4, scoped, tag = 'scoped memory for net_forward.1']
    #allocation4 [shape = 's32[1]{0}', space=sflag, size = 0x4, scoped, tag = 'scoped memory for net_forward.1']
    #allocation5 [shape = 'u8[4096]{0}', space=vmem, size = 0x1000, scoped, tag = 'output window, operand 0, single buffered']
    %12 = vsyncpa [#allocation3], 0
    %13 = vsyncpa [#allocation4], 0
    // Predicated region
    $region2: #{net_forward.1} parent=1 // pred_check
      _
    $region3: #{net_forward.1} parent=1 // pred_check_branch
      %15 = sbr.rel (0) target = $region5
    $region4: #{net_forward.1} parent=1 // pred_region
      _
    $region5: #{net_forward.1} parent=1 // pred_fallthru
      _
    // Predicated region
    $region6: #{net_forward.1} parent=1 // pred_check
      _
    $region7: #{net_forward.1} parent=1 // pred_check_branch
      %17 = sbr.rel (0) target = $region9
    $region8: #{net_forward.1} parent=1 // pred_region
      %19 = vsyncadd [#allocation3], 0
      %s20 = sshll.u32 %s1, 4
      %s21 = int_to_ptr.hbm [resolvable:$true] %s20
      %s22 = sshll.u32 [#allocation2], 4
      %s23 = int_to_ptr.vmem [resolvable:$true] %s22
      %28 = dma.hbm_to_vmem [thread:$0]  %s21, 512, %s23, [#allocation3], 128, 128, 8
    $region9: #{net_forward.1} parent=1 // pred_fallthru
      _
    // Predicated region
    $region10: #{net_forward.1} parent=1 // pred_check
      _
    $region11: #{net_forward.1} parent=1 // pred_check_branch
      %30 = sbr.rel (0) target = $region13
    $region12: #{net_forward.1} parent=1 // pred_region
      _
    $region13: #{net_forward.1} parent=1 // pred_fallthru
      _
    // Predicated region
    $region14: #{net_forward.1} parent=1 // pred_check
      _
    $region15: #{net_forward.1} parent=1 // pred_check_branch
      %32 = sbr.rel (0) target = $region17
    $region16: #{net_forward.1} parent=1 // pred_region
      _
    $region17: #{net_forward.1} parent=1 // pred_fallthru
      _
    // Predicated region
    $region18: #{net_forward.1} parent=1 // pred_check
      _
    $region19: #{net_forward.1} parent=1 // pred_check_branch
      %34 = sbr.rel (0) target = $region21
    $region20: #{net_forward.1} parent=1 // pred_region
      _
    $region21: #{net_forward.1} parent=1 // pred_fallthru
      _
    // Predicated region
    $region22: #{net_forward.1} parent=1 // pred_check
      _
    $region23: #{net_forward.1} parent=1 // pred_check_branch
      %36 = sbr.rel (0) target = $region25
    $region24: #{net_forward.1} parent=1 // pred_region
      _
    $region25: #{net_forward.1} parent=1 // pred_fallthru
      _
    // Predicated region
    $region26: #{net_forward.1} parent=1 // pred_check
      _
    $region27: #{net_forward.1} parent=1 // pred_check_branch
      %38 = sbr.rel (0) target = $region29
    $region28: #{net_forward.1} parent=1 // pred_region
      _
    $region29: #{net_forward.1} parent=1 // pred_fallthru
      _
    // Predicated region
    $region30: #{net_forward.1} parent=1 // pred_check
      _
    $region31: #{net_forward.1} parent=1 // pred_check_branch
      %40 = sbr.rel (0) target = $region33
    $region32: #{net_forward.1} parent=1 // pred_region
      %42 = dma.done [#allocation3], 512
    $region33: #{net_forward.1} parent=1 // pred_fallthru
      _
    %v43 = vld [vmem:[%s0] sm:$0xff]
    %v44 = vld [vmem:[#allocation2] sm:$0xff]
    %v45 = vld [vmem:[#allocation2 + $0x8] sm:$0xff]
    %v46 = vld [vmem:[#allocation2 + $0x10] sm:$0xff]
    %v47 = vld [vmem:[#allocation2 + $0x18] sm:$0xff]
    %v48 = vld [vmem:[%s2] sm:$0x1]
    %v50 = vperm.slane %v48, 0
    %vm52 = vcmask 261120
    %v54 = vsel %vm52, %v43, 0
    %56 = vmatpush.msra.mxu0 0.0
    %57 = vmatpush.msra.mxu0 0.0
    %58 = vmatpush.msra.mxu0 0.0
    %59 = vmatpush.msra.mxu0 0.0
    %60 = vmatpush.msra.mxu0 0.0
    %61 = vmatpush.msra.mxu0 0.0
    %62 = vmatpush.msra.mxu0 0.0
    %63 = vmatpush.msra.mxu0 0.0
    %64 = vmatpush.msra.mxu0 0.0
    %65 = vmatpush.msra.mxu0 0.0
    %66 = vmatpush.msra.mxu0 0.0
    %67 = vmatpush.msra.mxu0 0.0
    %68 = vmatpush.msra.mxu0 %v47
    %69 = vmatpush.msra.mxu0 %v46
    %70 = vmatpush.msra.mxu0 %v45
    %71 = vmatpush.msra.mxu0 %v44
    %72 = vmatmul.f32.gmra.mxu0 %v54
    %v73 = vpop.f32.mrf.mxu0
    %v74 = vadd.f32 %v50, %v73
    %75 = vdwg.mxu0
    %v76 = vmax.f32 %v74, 0.0
    %v77 = vld [vmem:[%s3] sm:$0xff]
    %v78 = vld [vmem:[%s3 + $0x8] sm:$0xff]
    %v79 = vld [vmem:[%s3 + $0x10] sm:$0xff]
    %v80 = vld [vmem:[%s3 + $0x18] sm:$0xff]
    %v81 = vld [vmem:[%s3 + $0x20] sm:$0xff]
    %v82 = vld [vmem:[%s3 + $0x28] sm:$0xff]
    %v83 = vld [vmem:[%s3 + $0x30] sm:$0xff]
    %v84 = vld [vmem:[%s3 + $0x38] sm:$0xff]
    %v85 = vld [vmem:[%s3 + $0x40] sm:$0xff]
    %v86 = vld [vmem:[%s3 + $0x48] sm:$0xff]
    %v87 = vld [vmem:[%s3 + $0x50] sm:$0xff]
    %v88 = vld [vmem:[%s3 + $0x58] sm:$0xff]
    %v89 = vld [vmem:[%s3 + $0x60] sm:$0xff]
    %v90 = vld [vmem:[%s3 + $0x68] sm:$0xff]
    %v91 = vld [vmem:[%s3 + $0x70] sm:$0xff]
    %v92 = vld [vmem:[%s3 + $0x78] sm:$0xff]
    %v93 = vld [vmem:[%s4] sm:$0x1]
    %v95 = vperm.slane %v93, 0
    %97 = vmatpush.msra.mxu0 %v92
    %98 = vmatpush.msra.mxu0 %v91
    %99 = vmatpush.msra.mxu0 %v90
    %100 = vmatpush.msra.mxu0 %v89
    %101 = vmatpush.msra.mxu0 %v88
    %102 = vmatpush.msra.mxu0 %v87
    %103 = vmatpush.msra.mxu0 %v86
    %104 = vmatpush.msra.mxu0 %v85
    %105 = vmatpush.msra.mxu0 %v84
    %106 = vmatpush.msra.mxu0 %v83
    %107 = vmatpush.msra.mxu0 %v82
    %108 = vmatpush.msra.mxu0 %v81
    %109 = vmatpush.msra.mxu0 %v80
    %110 = vmatpush.msra.mxu0 %v79
    %111 = vmatpush.msra.mxu0 %v78
    %112 = vmatpush.msra.mxu0 %v77
    %113 = vmatmul.f32.gmra.mxu0 %v76
    %v114 = vpop.f32.mrf.mxu0
    %v115 = vadd.f32 %v95, %v114
    %116 = vdwg.mxu0
    %v117 = vmax.f32 %v115, 0.0
    %v118 = vld [vmem:[%s5] sm:$0xff]
    %v119 = vld [vmem:[%s5 + $0x8] sm:$0xff]
    %v120 = vld [vmem:[%s5 + $0x10] sm:$0xff]
    %v121 = vld [vmem:[%s5 + $0x18] sm:$0xff]
    %v122 = vld [vmem:[%s5 + $0x20] sm:$0xff]
    %v123 = vld [vmem:[%s5 + $0x28] sm:$0xff]
    %v124 = vld [vmem:[%s5 + $0x30] sm:$0xff]
    %v125 = vld [vmem:[%s5 + $0x38] sm:$0xff]
    %v126 = vld [vmem:[%s5 + $0x40] sm:$0xff]
    %v127 = vld [vmem:[%s5 + $0x48] sm:$0xff]
    %v128 = vld [vmem:[%s5 + $0x50] sm:$0xff]
    %v129 = vld [vmem:[%s5 + $0x58] sm:$0xff]
    %v130 = vld [vmem:[%s5 + $0x60] sm:$0xff]
    %v131 = vld [vmem:[%s5 + $0x68] sm:$0xff]
    %v132 = vld [vmem:[%s5 + $0x70] sm:$0xff]
    %v133 = vld [vmem:[%s5 + $0x78] sm:$0xff]
    %v134 = vld [vmem:[%s6] sm:$0x1]
    %v136 = vperm.slane %v134, 0
    %138 = vmatpush.msra.mxu0 %v133
    %139 = vmatpush.msra.mxu0 %v132
    %140 = vmatpush.msra.mxu0 %v131
    %141 = vmatpush.msra.mxu0 %v130
    %142 = vmatpush.msra.mxu0 %v129
    %143 = vmatpush.msra.mxu0 %v128
    %144 = vmatpush.msra.mxu0 %v127
    %145 = vmatpush.msra.mxu0 %v126
    %146 = vmatpush.msra.mxu0 %v125
    %147 = vmatpush.msra.mxu0 %v124
    %148 = vmatpush.msra.mxu0 %v123
    %149 = vmatpush.msra.mxu0 %v122
    %150 = vmatpush.msra.mxu0 %v121
    %151 = vmatpush.msra.mxu0 %v120
    %152 = vmatpush.msra.mxu0 %v119
    %153 = vmatpush.msra.mxu0 %v118
    %154 = vmatmul.f32.gmra.mxu0 %v117
    %v155 = vpop.f32.mrf.mxu0
    %v156 = vadd.f32 %v136, %v155
    %157 = vdwg.mxu0
    %vm158 = vcmask 130048
    %159 = vst.msk [vmem:[#allocation5] sm:$0xff] %vm158, %v156
    // Predicated region
    $region34: #{net_forward.1} parent=1 // pred_check
      _
    $region35: #{net_forward.1} parent=1 // pred_check_branch
      %161 = sbr.rel (0) target = $region37
    $region36: #{net_forward.1} parent=1 // pred_region
      %163 = vsyncadd [#allocation4], 0
      %s165 = sshll.u32 [#allocation5], 4
      %s166 = int_to_ptr.vmem [resolvable:$true] %s165
      %s167 = sshll.u32 %s7, 4
      %s168 = int_to_ptr.hbm [resolvable:$true] %s167
      %170 = dma.vmem_to_hbm [thread:$0]  %s166, 128, %s168, [#allocation4]
    $region37: #{net_forward.1} parent=1 // pred_fallthru
      _
    // Predicated region
    $region38: #{net_forward.1} parent=1 // pred_check
      _
    $region39: #{net_forward.1} parent=1 // pred_check_branch
      %172 = sbr.rel (0) target = $region41
    $region40: #{net_forward.1} parent=1 // pred_region
      %174 = dma.done [#allocation4], 128
    $region41: #{net_forward.1} parent=1 // pred_fallthru
      _
    %175 = vsyncpa [#allocation3], 1
    %176 = vsyncpa [#allocation4], 1

</llo_original>
